<compile_context>
chip_gen: v6e
topology: v6e:2x2x1
jax: 0.10.0
libtpu: 0.0.40
codegen_flags: <defaults>
</compile_context>

<pallas_src>
import functools

import jax
import jax.numpy as jnp
import numpy as np
from jax.experimental import pallas as pl
from jax.experimental.pallas import tpu as pltpu

_LANES = 128
_SUBLANE = 16  # satisfies both the f32 (8,128) and bf16 (16,128) tile constraints


def _plcc_stats_kernel(pivot_ref, x_ref, y_ref,
                       sx_ref, sy_ref, sxx_ref, syy_ref, sxy_ref,
                       *, block_rows, n_true):
    """Accumulate pivot-shifted first/second moments of one (block_rows, 128) tile."""
    s = pl.program_id(0)            # split index ("parallel"; shards TCs on v7x)
    k = pl.program_id(1)            # step within split ("arbitrary" / reduction)
    steps = pl.num_programs(1)

    @pl.when(k == 0)
    def _init():
        sx_ref[...] = jnp.zeros_like(sx_ref)
        sy_ref[...] = jnp.zeros_like(sy_ref)
        sxx_ref[...] = jnp.zeros_like(sxx_ref)
        syy_ref[...] = jnp.zeros_like(syy_ref)
        sxy_ref[...] = jnp.zeros_like(sxy_ref)

    px = pivot_ref[0]
    py = pivot_ref[1]
    # Per-tile upcast (bf16 inputs stream at half the HBM bytes); pivot shift
    # keeps the one-pass moments well conditioned for large-mean IQA scores.
    x = x_ref[...].astype(jnp.float32) - px
    y = y_ref[...].astype(jnp.float32) - py

    def _accumulate(xv, yv):
        # (tr, 128) -> (tr//8, 8, 128); reducing axis 0 is pure whole-vreg VPU
        # adds into (8, 128) accumulators (no per-step XLU sublane reduce).
        xs = xv.reshape(-1, 8, _LANES)
        ys = yv.reshape(-1, 8, _LANES)
        sx_ref[...] += jnp.sum(xs, axis=0, keepdims=True)
        sy_ref[...] += jnp.sum(ys, axis=0, keepdims=True)
        sxx_ref[...] += jnp.sum(xs * xs, axis=0, keepdims=True)
        syy_ref[...] += jnp.sum(ys * ys, axis=0, keepdims=True)
        sxy_ref[...] += jnp.sum(xs * ys, axis=0, keepdims=True)

    # Global position of this block in the flattened input.  The input
    # index_map clamps duplicated / overhanging blocks to valid rows, so the
    # DMA is always in-bounds; the mask below zeroes everything past n_true
    # (ragged tail, Pallas partial-block reads, clamped duplicate blocks).
    true_block = s * steps + k
    block_start = true_block * (block_rows * _LANES)
    needs_mask = block_start + block_rows * _LANES > n_true

    @pl.when(jnp.logical_not(needs_mask))
    def _fast():
        _accumulate(x, y)

    @pl.when(needs_mask)
    def _masked():
        elem = (block_start
                + jax.lax.broadcasted_iota(jnp.int32, (block_rows, _LANES), 0) * _LANES
                + jax.lax.broadcasted_iota(jnp.int32, (block_rows, _LANES), 1))
        valid = elem < n_true
        _accumulate(jnp.where(valid, x, 0.0), jnp.where(valid, y, 0.0))


def _default_block_rows():
    """Tile rows per grid step: ~1 MiB f32 per input block; bigger on v7x-class
    parts whose faster HBM needs larger tiles to amortize per-step overhead."""
    try:
        kind = jax.devices()[0].device_kind.lower()
    except Exception:
        return 2048
    if "v7" in kind:
        return 4096   # 2 MiB/block; 2 inputs x 2 buffers = 8 MiB, well within scoped VMEM
    return 2048       # v5e/v6e: 1 MiB/block already amortizes the ~0.35 us step cost


def _plcc_centered_jax(x, y, loss_weight):
    """Pure-JAX PLCC loss (centered, two-pass) for the small-N fast path."""
    vx = x - jnp.mean(x)
    vy = y - jnp.mean(y)
    nx = jnp.maximum(jnp.sqrt(jnp.sum(vx * vx)), 1e-12)   # F.normalize eps semantics
    ny = jnp.maximum(jnp.sqrt(jnp.sum(vy * vy)), 1e-12)
    corr = jnp.sum(vx * vy) / (nx * ny)
    return jnp.float32(loss_weight) * 0.5 * (1.0 - corr)


def srcc_loss_pallas(pred, target, *, loss_weight=1.0, block_rows=None,
                     min_pallas_elems=1 << 15):
    """SRCCLoss.forward(pred, target) for the documented (N, 1) / (N,) inputs."""
    assert pred.shape == target.shape
    assert pred.ndim == 1 or (pred.ndim == 2 and pred.shape[-1] == 1), (
        "SRCCLoss / plcc_loss is specified for (N, 1) predictions.")

    # torch.sort(x, dim=-1): identity for the documented (N, 1) shape (rows of
    # length 1).  Only 1-D inputs hit a real sort.
    if pred.shape[-1] > 1:
        # TODO(synk): data-dependent sort has no clean Pallas TPU equivalent;
        # it is done with jnp.sort in the wrapper, PLCC itself runs in Pallas.
        pred = jnp.sort(pred, axis=-1)
        target = jnp.sort(target, axis=-1)

    batch = pred.shape[0]
    n = int(np.prod(pred.shape))

    # Keep bf16 inputs in bf16 (half the streamed HBM bytes); everything else f32.
    if pred.dtype == jnp.bfloat16 and target.dtype == jnp.bfloat16:
        in_dtype = jnp.bfloat16
    else:
        in_dtype = jnp.float32
    x = pred.reshape(-1).astype(in_dtype)
    y = target.reshape(-1).astype(in_dtype)

    if batch <= 1:
        # plcc_loss batch_size == 1 branch: F.l1_loss (trivial scalar op).
        return jnp.float32(loss_weight) * jnp.mean(
            jnp.abs(x.astype(jnp.float32) - y.astype(jnp.float32)))

    if n < min_pallas_elems:
        # Small N: pallas_call fixed cost + wrapper plumbing dominate; plain XLA wins.
        return _plcc_centered_jax(x.astype(jnp.float32), y.astype(jnp.float32),
                                  loss_weight)

    # ---- Pallas streaming path -------------------------------------------
    rows = -(-n // _LANES)
    rows_p = -(-rows // _SUBLANE) * _SUBLANE
    n_padded = rows_p * _LANES
    if n_padded != n:
        # Only the ragged case pays a pad copy (to the next 16-row boundary);
        # the pad *value* is irrelevant: the kernel masks against n.
        x = jnp.pad(x, (0, n_padded - n))
        y = jnp.pad(y, (0, n_padded - n))
    x2 = x.reshape(rows_p, _LANES)     # free reshape when n % 2048 == 0
    y2 = y.reshape(rows_p, _LANES)

    if block_rows is None:
        block_rows = _default_block_rows()
    tr = min(int(block_rows), rows_p)
    tr = max(_SUBLANE, (tr // _SUBLANE) * _SUBLANE)
    row_blocks = -(-rows_p // tr)
    nsplit = 2 if row_blocks >= 2 else 1   # shards across 2 TCs on v7x
    steps = -(-row_blocks // nsplit)

    # Pivot = first element of each input (SMEM scalars), used for the
    # cancellation-safe shifted accumulation.  Correlation is shift-invariant.
    pivots = jnp.stack([x2[0, 0], y2[0, 0]]).astype(jnp.float32)

    last_block = row_blocks - 1

    def in_index_map(s, k):
        # Clamp so every DMA stays in bounds; duplicated blocks are fully
        # masked in-kernel (their true element indices are >= n).
        return (jnp.minimum(s * steps + k, last_block), 0)

    def out_index_map(s, k):
        return (s, 0, 0)   # constant along k -> output block is the accumulator

    kernel = functools.partial(_plcc_stats_kernel, block_rows=tr, n_true=n)

    stat_shape = jax.ShapeDtypeStruct((nsplit, 8, _LANES), jnp.float32)
    elem_bytes = 2 if in_dtype == jnp.bfloat16 else 4
    cost = pl.CostEstimate(
        flops=10 * nsplit * steps * tr * _LANES,   # 2 sub + 3 mul + 5 add per elem
        transcendentals=0,
        bytes_accessed=2 * rows_p * _LANES * elem_bytes
        + 5 * nsplit * 8 * _LANES * 4)

    # TODO(synk): once tiles are >=1 MiB, sweep pipeline_mode=pl.Buffered(3) on
    # the two input BlockSpecs (typically <5%, nearly free in VMEM).
    sx, sy, sxx, syy, sxy = pl.pallas_call(
        kernel,
        out_shape=[stat_shape] * 5,
        grid=(nsplit, steps),
        in_specs=[
            pl.BlockSpec(memory_space=pltpu.MemorySpace.SMEM),  # pivots
            pl.BlockSpec((tr, _LANES), in_index_map),
            pl.BlockSpec((tr, _LANES), in_index_map),
        ],
        out_specs=[pl.BlockSpec((1, 8, _LANES), out_index_map) for _ in range(5)],
        compiler_params=pltpu.CompilerParams(
            dimension_semantics=("parallel", "arbitrary")),
        cost_estimate=cost,
    )(pivots, x2, y2)

    # ---- trivial scalar finalize (wrapper) --------------------------------
    n_f = jnp.float32(n)
    sx = jnp.sum(sx)
    sy = jnp.sum(sy)
    sxx = jnp.sum(sxx)
    syy = jnp.sum(syy)
    sxy = jnp.sum(sxy)
    mx = sx / n_f
    my = sy / n_f
    cov = sxy - n_f * mx * my                      # sum((x - mean_x) * (y - mean_y))
    vxx = jnp.maximum(sxx - n_f * mx * mx, 0.0)    # ||x - mean_x||^2
    vyy = jnp.maximum(syy - n_f * my * my, 0.0)    # ||y - mean_y||^2
    nx = jnp.maximum(jnp.sqrt(vxx), 1e-12)         # F.normalize eps semantics
    ny = jnp.maximum(jnp.sqrt(vyy), 1e-12)
    corr = cov / (nx * ny)
    return jnp.float32(loss_weight) * 0.5 * (1.0 - corr)


def srcc_loss_ref(pred, target, loss_weight=1.0):
    """Pure-JAX reference matching the PyTorch SRCCLoss.forward."""
    pred = jnp.sort(pred.astype(jnp.float32), axis=-1)
    target = jnp.sort(target.astype(jnp.float32), axis=-1)
    batch = pred.shape[0]
    if batch > 1:
        vx = pred - jnp.mean(pred)
        vy = target - jnp.mean(target)
        nx = jnp.maximum(jnp.sqrt(jnp.sum(vx * vx)), 1e-12)
        ny = jnp.maximum(jnp.sqrt(jnp.sum(vy * vy)), 1e-12)
        loss = (1.0 - jnp.sum((vx / nx) * (vy / ny))) / 2.0
    else:
        loss = jnp.mean(jnp.abs(pred - target))
    return loss_weight * loss


if __name__ == "__main__":
    key = jax.random.PRNGKey(0)
    ks = jax.random.split(key, 8)

    # 1) Documented shape: (N, 1) IQA scores with a large mean (small N ->
    #    pure-JAX fast path).
    N = 16
    pred = 70.0 + 5.0 * jax.random.normal(ks[0], (N, 1), dtype=jnp.float32)
    target = 0.7 * pred + 2.0 * jax.random.normal(ks[1], (N, 1), dtype=jnp.float32)
    out = jax.block_until_ready(srcc_loss_pallas(pred, target, loss_weight=1.0))
    ref = jax.block_until_ready(srcc_loss_ref(pred, target, loss_weight=1.0))
    assert np.allclose(np.asarray(out), np.asarray(ref), rtol=1e-5, atol=1e-5), (out, ref)

    # 2) 1-D ragged length forced through the Pallas kernel: real sort along
    #    dim=-1, single-block grid, in-kernel element mask for the tail.
    M = 3000
    p2 = 70.0 + 5.0 * jax.random.normal(ks[2], (M,), dtype=jnp.float32)
    t2 = 0.5 * p2 + 3.0 * jax.random.normal(ks[3], (M,), dtype=jnp.float32)
    out2 = jax.block_until_ready(
        srcc_loss_pallas(p2, t2, loss_weight=2.0, min_pallas_elems=0))
    ref2 = jax.block_until_ready(srcc_loss_ref(p2, t2, loss_weight=2.0))
    assert np.allclose(np.asarray(out2), np.asarray(ref2), rtol=1e-4, atol=1e-5), (out2, ref2)

    # 3) Multi-block with an odd block count: exercises the 2-way (megacore)
    #    split, the clamped duplicate block, the zero-copy fast path and the
    #    pivot-shifted accumulation on large-mean data.
    M3 = 5 * 128 * 128   # rows=640 -> 5 blocks of 128 rows -> grid (2, 3)
    p3 = 70.0 + 5.0 * jax.random.normal(ks[4], (M3,), dtype=jnp.float32)
    t3 = 0.8 * p3 + 2.0 * jax.random.normal(ks[5], (M3,), dtype=jnp.float32)
    out3 = jax.block_until_ready(
        srcc_loss_pallas(p3, t3, loss_weight=1.0, block_rows=128, min_pallas_elems=0))
    ref3 = jax.block_until_ready(srcc_loss_ref(p3, t3, loss_weight=1.0))
    assert np.allclose(np.asarray(out3), np.asarray(ref3), rtol=1e-4, atol=1e-5), (out3, ref3)

    # 4) bf16 inputs streamed as bf16 (half the HBM bytes), f32 accumulation.
    M4 = 4096
    p4 = (60.0 + 4.0 * jax.random.normal(ks[6], (M4,), dtype=jnp.float32)).astype(jnp.bfloat16)
    t4 = (0.6 * p4.astype(jnp.float32)
          + 3.0 * jax.random.normal(ks[7], (M4,), dtype=jnp.float32)).astype(jnp.bfloat16)
    out4 = jax.block_until_ready(
        srcc_loss_pallas(p4, t4, loss_weight=1.0, min_pallas_elems=0))
    ref4 = jax.block_until_ready(srcc_loss_ref(p4, t4, loss_weight=1.0))
    assert np.allclose(np.asarray(out4), np.asarray(ref4), rtol=1e-3, atol=1e-4), (out4, ref4)

    print("KERNEL_OK")
</pallas_src>

<mosaic_0001>
module attributes {stable_mosaic.version = 11 : i64} {
  func.func @_plcc_stats_kernel(%arg0: i32, %arg1: i32, %arg2: memref<2xf32, #tpu.memory_space<smem>>, %arg3: memref<32x128xf32, #tpu.memory_space<vmem>>, %arg4: memref<32x128xf32, #tpu.memory_space<vmem>>, %arg5: memref<1x8x128xf32, #tpu.memory_space<vmem>>, %arg6: memref<1x8x128xf32, #tpu.memory_space<vmem>>, %arg7: memref<1x8x128xf32, #tpu.memory_space<vmem>>, %arg8: memref<1x8x128xf32, #tpu.memory_space<vmem>>, %arg9: memref<1x8x128xf32, #tpu.memory_space<vmem>>) attributes {dimension_semantics = [#tpu.dimension_semantics<parallel>, #tpu.dimension_semantics<arbitrary>], iteration_bounds = array<i64: 1, 1>, scalar_prefetch = 0 : i64, scratch_operands = 0 : i64, tpu.core_type = #tpu.core_type<tc>, window_params = [{transform_indices = @transform_0, window_bounds = array<i64: 2>}, {transform_indices = @transform_1, window_bounds = array<i64: 32, 128>}, {transform_indices = @transform_2, window_bounds = array<i64: 32, 128>}, {transform_indices = @transform_3, window_bounds = array<i64: 1, 8, 128>}, {transform_indices = @transform_4, window_bounds = array<i64: 1, 8, 128>}, {transform_indices = @transform_5, window_bounds = array<i64: 1, 8, 128>}, {transform_indices = @transform_6, window_bounds = array<i64: 1, 8, 128>}, {transform_indices = @transform_7, window_bounds = array<i64: 1, 8, 128>}]} {
    %c0_i32 = arith.constant 0 : i32
    %0 = arith.cmpi eq, %arg1, %c0_i32 : i32
    %1 = arith.extui %0 : i1 to i32
    %c0_i32_0 = arith.constant 0 : i32
    %2 = arith.cmpi ne, %1, %c0_i32_0 : i32
    scf.if %2 {
      %cst = arith.constant 0.000000e+00 : f32
      %21 = vector.broadcast %cst : f32 to vector<1x8x128xf32>
      %c0_8 = arith.constant 0 : index
      %c0_9 = arith.constant 0 : index
      %c0_10 = arith.constant 0 : index
      %22 = vector.load %arg5[%c0_8, %c0_9, %c0_10] : memref<1x8x128xf32, #tpu.memory_space<vmem>>, vector<1x8x128xf32>
      tpu.vector_store %arg5[%c0_8, %c0_9, %c0_10], %21 {strides = array<i32>} : memref<1x8x128xf32, #tpu.memory_space<vmem>>, vector<1x8x128xf32>,
      %cst_11 = arith.constant 0.000000e+00 : f32
      %23 = vector.broadcast %cst_11 : f32 to vector<1x8x128xf32>
      %c0_12 = arith.constant 0 : index
      %c0_13 = arith.constant 0 : index
      %c0_14 = arith.constant 0 : index
      %24 = vector.load %arg6[%c0_12, %c0_13, %c0_14] : memref<1x8x128xf32, #tpu.memory_space<vmem>>, vector<1x8x128xf32>
      tpu.vector_store %arg6[%c0_12, %c0_13, %c0_14], %23 {strides = array<i32>} : memref<1x8x128xf32, #tpu.memory_space<vmem>>, vector<1x8x128xf32>,
      %cst_15 = arith.constant 0.000000e+00 : f32
      %25 = vector.broadcast %cst_15 : f32 to vector<1x8x128xf32>
      %c0_16 = arith.constant 0 : index
      %c0_17 = arith.constant 0 : index
      %c0_18 = arith.constant 0 : index
      %26 = vector.load %arg7[%c0_16, %c0_17, %c0_18] : memref<1x8x128xf32, #tpu.memory_space<vmem>>, vector<1x8x128xf32>
      tpu.vector_store %arg7[%c0_16, %c0_17, %c0_18], %25 {strides = array<i32>} : memref<1x8x128xf32, #tpu.memory_space<vmem>>, vector<1x8x128xf32>,
      %cst_19 = arith.constant 0.000000e+00 : f32
      %27 = vector.broadcast %cst_19 : f32 to vector<1x8x128xf32>
      %c0_20 = arith.constant 0 : index
      %c0_21 = arith.constant 0 : index
      %c0_22 = arith.constant 0 : index
      %28 = vector.load %arg8[%c0_20, %c0_21, %c0_22] : memref<1x8x128xf32, #tpu.memory_space<vmem>>, vector<1x8x128xf32>
      tpu.vector_store %arg8[%c0_20, %c0_21, %c0_22], %27 {strides = array<i32>} : memref<1x8x128xf32, #tpu.memory_space<vmem>>, vector<1x8x128xf32>,
      %cst_23 = arith.constant 0.000000e+00 : f32
      %29 = vector.broadcast %cst_23 : f32 to vector<1x8x128xf32>
      %c0_24 = arith.constant 0 : index
      %c0_25 = arith.constant 0 : index
      %c0_26 = arith.constant 0 : index
      %30 = vector.load %arg9[%c0_24, %c0_25, %c0_26] : memref<1x8x128xf32, #tpu.memory_space<vmem>>, vector<1x8x128xf32>
      tpu.vector_store %arg9[%c0_24, %c0_25, %c0_26], %29 {strides = array<i32>} : memref<1x8x128xf32, #tpu.memory_space<vmem>>, vector<1x8x128xf32>,
    } else {
    }
    %c0 = arith.constant 0 : index
    %3 = memref.load %arg2[%c0] : memref<2xf32, #tpu.memory_space<smem>>
    %c1 = arith.constant 1 : index
    %4 = memref.load %arg2[%c1] : memref<2xf32, #tpu.memory_space<smem>>
    %c0_1 = arith.constant 0 : index
    %c0_2 = arith.constant 0 : index
    %5 = vector.load %arg3[%c0_1, %c0_2] : memref<32x128xf32, #tpu.memory_space<vmem>>, vector<32x128xf32>
    %6 = vector.broadcast %3 : f32 to vector<32x128xf32>
    %7 = arith.subf %5, %6 : vector<32x128xf32>
    %c0_3 = arith.constant 0 : index
    %c0_4 = arith.constant 0 : index
    %8 = vector.load %arg4[%c0_3, %c0_4] : memref<32x128xf32, #tpu.memory_space<vmem>>, vector<32x128xf32>
    %9 = vector.broadcast %4 : f32 to vector<32x128xf32>
    %10 = arith.subf %8, %9 : vector<32x128xf32>
    %c1_i32 = arith.constant 1 : i32
    %11 = arith.muli %arg0, %c1_i32 : i32
    %12 = arith.addi %11, %arg1 : i32
    %c4096_i32 = arith.constant 4096 : i32
    %13 = arith.muli %12, %c4096_i32 : i32
    %c4096_i32_5 = arith.constant 4096 : i32
    %14 = arith.addi %13, %c4096_i32_5 : i32
    %c3000_i32 = arith.constant 3000 : i32
    %15 = arith.cmpi sgt, %14, %c3000_i32 : i32
    %true = arith.constant true
    %16 = arith.xori %15, %true : i1
    %17 = arith.extui %16 : i1 to i32
    %c0_i32_6 = arith.constant 0 : i32
    %18 = arith.cmpi ne, %17, %c0_i32_6 : i32
    scf.if %18 {
      %21 = vector.shape_cast %7 : vector<32x128xf32> to vector<4x8x128xf32>
      %22 = vector.shape_cast %10 : vector<32x128xf32> to vector<4x8x128xf32>
      %c0_8 = arith.constant 0 : index
      %c0_9 = arith.constant 0 : index
      %c0_10 = arith.constant 0 : index
      %23 = vector.load %arg5[%c0_8, %c0_9, %c0_10] : memref<1x8x128xf32, #tpu.memory_space<vmem>>, vector<1x8x128xf32>
      %cst = arith.constant dense<0.000000e+00> : vector<8x128xf32>
      %24 = vector.multi_reduction <add>, %21, %cst [0] : vector<4x8x128xf32> to vector<8x128xf32>
      %25 = vector.shape_cast %24 : vector<8x128xf32> to vector<1x8x128xf32>
      %26 = arith.addf %23, %25 : vector<1x8x128xf32>
      %c0_11 = arith.constant 0 : index
      %c0_12 = arith.constant 0 : index
      %c0_13 = arith.constant 0 : index
      %27 = vector.load %arg5[%c0_11, %c0_12, %c0_13] : memref<1x8x128xf32, #tpu.memory_space<vmem>>, vector<1x8x128xf32>
      tpu.vector_store %arg5[%c0_11, %c0_12, %c0_13], %26 {strides = array<i32>} : memref<1x8x128xf32, #tpu.memory_space<vmem>>, vector<1x8x128xf32>,
      %c0_14 = arith.constant 0 : index
      %c0_15 = arith.constant 0 : index
      %c0_16 = arith.constant 0 : index
      %28 = vector.load %arg6[%c0_14, %c0_15, %c0_16] : memref<1x8x128xf32, #tpu.memory_space<vmem>>, vector<1x8x128xf32>
      %cst_17 = arith.constant dense<0.000000e+00> : vector<8x128xf32>
      %29 = vector.multi_reduction <add>, %22, %cst_17 [0] : vector<4x8x128xf32> to vector<8x128xf32>
      %30 = vector.shape_cast %29 : vector<8x128xf32> to vector<1x8x128xf32>
      %31 = arith.addf %28, %30 : vector<1x8x128xf32>
      %c0_18 = arith.constant 0 : index
      %c0_19 = arith.constant 0 : index
      %c0_20 = arith.constant 0 : index
      %32 = vector.load %arg6[%c0_18, %c0_19, %c0_20] : memref<1x8x128xf32, #tpu.memory_space<vmem>>, vector<1x8x128xf32>
      tpu.vector_store %arg6[%c0_18, %c0_19, %c0_20], %31 {strides = array<i32>} : memref<1x8x128xf32, #tpu.memory_space<vmem>>, vector<1x8x128xf32>,
      %c0_21 = arith.constant 0 : index
      %c0_22 = arith.constant 0 : index
      %c0_23 = arith.constant 0 : index
      %33 = vector.load %arg7[%c0_21, %c0_22, %c0_23] : memref<1x8x128xf32, #tpu.memory_space<vmem>>, vector<1x8x128xf32>
      %34 = arith.mulf %21, %21 : vector<4x8x128xf32>
      %cst_24 = arith.constant dense<0.000000e+00> : vector<8x128xf32>
      %35 = vector.multi_reduction <add>, %34, %cst_24 [0] : vector<4x8x128xf32> to vector<8x128xf32>
      %36 = vector.shape_cast %35 : vector<8x128xf32> to vector<1x8x128xf32>
      %37 = arith.addf %33, %36 : vector<1x8x128xf32>
      %c0_25 = arith.constant 0 : index
      %c0_26 = arith.constant 0 : index
      %c0_27 = arith.constant 0 : index
      %38 = vector.load %arg7[%c0_25, %c0_26, %c0_27] : memref<1x8x128xf32, #tpu.memory_space<vmem>>, vector<1x8x128xf32>
      tpu.vector_store %arg7[%c0_25, %c0_26, %c0_27], %37 {strides = array<i32>} : memref<1x8x128xf32, #tpu.memory_space<vmem>>, vector<1x8x128xf32>,
      %c0_28 = arith.constant 0 : index
      %c0_29 = arith.constant 0 : index
      %c0_30 = arith.constant 0 : index
      %39 = vector.load %arg8[%c0_28, %c0_29, %c0_30] : memref<1x8x128xf32, #tpu.memory_space<vmem>>, vector<1x8x128xf32>
      %40 = arith.mulf %22, %22 : vector<4x8x128xf32>
      %cst_31 = arith.constant dense<0.000000e+00> : vector<8x128xf32>
      %41 = vector.multi_reduction <add>, %40, %cst_31 [0] : vector<4x8x128xf32> to vector<8x128xf32>
      %42 = vector.shape_cast %41 : vector<8x128xf32> to vector<1x8x128xf32>
      %43 = arith.addf %39, %42 : vector<1x8x128xf32>
      %c0_32 = arith.constant 0 : index
      %c0_33 = arith.constant 0 : index
      %c0_34 = arith.constant 0 : index
      %44 = vector.load %arg8[%c0_32, %c0_33, %c0_34] : memref<1x8x128xf32, #tpu.memory_space<vmem>>, vector<1x8x128xf32>
      tpu.vector_store %arg8[%c0_32, %c0_33, %c0_34], %43 {strides = array<i32>} : memref<1x8x128xf32, #tpu.memory_space<vmem>>, vector<1x8x128xf32>,
      %c0_35 = arith.constant 0 : index
      %c0_36 = arith.constant 0 : index
      %c0_37 = arith.constant 0 : index
      %45 = vector.load %arg9[%c0_35, %c0_36, %c0_37] : memref<1x8x128xf32, #tpu.memory_space<vmem>>, vector<1x8x128xf32>
      %46 = arith.mulf %21, %22 : vector<4x8x128xf32>
      %cst_38 = arith.constant dense<0.000000e+00> : vector<8x128xf32>
      %47 = vector.multi_reduction <add>, %46, %cst_38 [0] : vector<4x8x128xf32> to vector<8x128xf32>
      %48 = vector.shape_cast %47 : vector<8x128xf32> to vector<1x8x128xf32>
      %49 = arith.addf %45, %48 : vector<1x8x128xf32>
      %c0_39 = arith.constant 0 : index
      %c0_40 = arith.constant 0 : index
      %c0_41 = arith.constant 0 : index
      %50 = vector.load %arg9[%c0_39, %c0_40, %c0_41] : memref<1x8x128xf32, #tpu.memory_space<vmem>>, vector<1x8x128xf32>
      tpu.vector_store %arg9[%c0_39, %c0_40, %c0_41], %49 {strides = array<i32>} : memref<1x8x128xf32, #tpu.memory_space<vmem>>, vector<1x8x128xf32>,
    } else {
    }
    %19 = arith.extui %15 : i1 to i32
    %c0_i32_7 = arith.constant 0 : i32
    %20 = arith.cmpi ne, %19, %c0_i32_7 : i32
    scf.if %20 {
      %21 = tpu.iota {dimensions = array<i32: 0>} : vector<32x128xi32>
      %c128_i32 = arith.constant 128 : i32
      %22 = vector.broadcast %c128_i32 : i32 to vector<32x128xi32>
      %23 = arith.muli %21, %22 : vector<32x128xi32>
      %24 = vector.broadcast %13 : i32 to vector<32x128xi32>
      %25 = arith.addi %24, %23 : vector<32x128xi32>
      %26 = tpu.iota {dimensions = array<i32: 1>} : vector<32x128xi32>
      %27 = arith.addi %25, %26 : vector<32x128xi32>
      %c3000_i32_8 = arith.constant 3000 : i32
      %28 = vector.broadcast %c3000_i32_8 : i32 to vector<32x128xi32>
      %29 = arith.cmpi slt, %27, %28 : vector<32x128xi32>
      %cst = arith.constant 0.000000e+00 : f32
      %30 = vector.broadcast %cst : f32 to vector<32x128xf32>
      %31 = arith.select %29, %7, %30 : vector<32x128xi1>, vector<32x128xf32>
      %cst_9 = arith.constant 0.000000e+00 : f32
      %32 = vector.broadcast %cst_9 : f32 to vector<32x128xf32>
      %33 = arith.select %29, %10, %32 : vector<32x128xi1>, vector<32x128xf32>
      %34 = vector.shape_cast %31 : vector<32x128xf32> to vector<4x8x128xf32>
      %35 = vector.shape_cast %33 : vector<32x128xf32> to vector<4x8x128xf32>
      %c0_10 = arith.constant 0 : index
      %c0_11 = arith.constant 0 : index
      %c0_12 = arith.constant 0 : index
      %36 = vector.load %arg5[%c0_10, %c0_11, %c0_12] : memref<1x8x128xf32, #tpu.memory_space<vmem>>, vector<1x8x128xf32>
      %cst_13 = arith.constant dense<0.000000e+00> : vector<8x128xf32>
      %37 = vector.multi_reduction <add>, %34, %cst_13 [0] : vector<4x8x128xf32> to vector<8x128xf32>
      %38 = vector.shape_cast %37 : vector<8x128xf32> to vector<1x8x128xf32>
      %39 = arith.addf %36, %38 : vector<1x8x128xf32>
      %c0_14 = arith.constant 0 : index
      %c0_15 = arith.constant 0 : index
      %c0_16 = arith.constant 0 : index
      %40 = vector.load %arg5[%c0_14, %c0_15, %c0_16] : memref<1x8x128xf32, #tpu.memory_space<vmem>>, vector<1x8x128xf32>
      tpu.vector_store %arg5[%c0_14, %c0_15, %c0_16], %39 {strides = array<i32>} : memref<1x8x128xf32, #tpu.memory_space<vmem>>, vector<1x8x128xf32>,
      %c0_17 = arith.constant 0 : index
      %c0_18 = arith.constant 0 : index
      %c0_19 = arith.constant 0 : index
      %41 = vector.load %arg6[%c0_17, %c0_18, %c0_19] : memref<1x8x128xf32, #tpu.memory_space<vmem>>, vector<1x8x128xf32>
      %cst_20 = arith.constant dense<0.000000e+00> : vector<8x128xf32>
      %42 = vector.multi_reduction <add>, %35, %cst_20 [0] : vector<4x8x128xf32> to vector<8x128xf32>
      %43 = vector.shape_cast %42 : vector<8x128xf32> to vector<1x8x128xf32>
      %44 = arith.addf %41, %43 : vector<1x8x128xf32>
      %c0_21 = arith.constant 0 : index
      %c0_22 = arith.constant 0 : index
      %c0_23 = arith.constant 0 : index
      %45 = vector.load %arg6[%c0_21, %c0_22, %c0_23] : memref<1x8x128xf32, #tpu.memory_space<vmem>>, vector<1x8x128xf32>
      tpu.vector_store %arg6[%c0_21, %c0_22, %c0_23], %44 {strides = array<i32>} : memref<1x8x128xf32, #tpu.memory_space<vmem>>, vector<1x8x128xf32>,
      %c0_24 = arith.constant 0 : index
      %c0_25 = arith.constant 0 : index
      %c0_26 = arith.constant 0 : index
      %46 = vector.load %arg7[%c0_24, %c0_25, %c0_26] : memref<1x8x128xf32, #tpu.memory_space<vmem>>, vector<1x8x128xf32>
      %47 = arith.mulf %34, %34 : vector<4x8x128xf32>
      %cst_27 = arith.constant dense<0.000000e+00> : vector<8x128xf32>
      %48 = vector.multi_reduction <add>, %47, %cst_27 [0] : vector<4x8x128xf32> to vector<8x128xf32>
      %49 = vector.shape_cast %48 : vector<8x128xf32> to vector<1x8x128xf32>
      %50 = arith.addf %46, %49 : vector<1x8x128xf32>
      %c0_28 = arith.constant 0 : index
      %c0_29 = arith.constant 0 : index
      %c0_30 = arith.constant 0 : index
      %51 = vector.load %arg7[%c0_28, %c0_29, %c0_30] : memref<1x8x128xf32, #tpu.memory_space<vmem>>, vector<1x8x128xf32>
      tpu.vector_store %arg7[%c0_28, %c0_29, %c0_30], %50 {strides = array<i32>} : memref<1x8x128xf32, #tpu.memory_space<vmem>>, vector<1x8x128xf32>,
      %c0_31 = arith.constant 0 : index
      %c0_32 = arith.constant 0 : index
      %c0_33 = arith.constant 0 : index
      %52 = vector.load %arg8[%c0_31, %c0_32, %c0_33] : memref<1x8x128xf32, #tpu.memory_space<vmem>>, vector<1x8x128xf32>
      %53 = arith.mulf %35, %35 : vector<4x8x128xf32>
      %cst_34 = arith.constant dense<0.000000e+00> : vector<8x128xf32>
      %54 = vector.multi_reduction <add>, %53, %cst_34 [0] : vector<4x8x128xf32> to vector<8x128xf32>
      %55 = vector.shape_cast %54 : vector<8x128xf32> to vector<1x8x128xf32>
      %56 = arith.addf %52, %55 : vector<1x8x128xf32>
      %c0_35 = arith.constant 0 : index
      %c0_36 = arith.constant 0 : index
      %c0_37 = arith.constant 0 : index
      %57 = vector.load %arg8[%c0_35, %c0_36, %c0_37] : memref<1x8x128xf32, #tpu.memory_space<vmem>>, vector<1x8x128xf32>
      tpu.vector_store %arg8[%c0_35, %c0_36, %c0_37], %56 {strides = array<i32>} : memref<1x8x128xf32, #tpu.memory_space<vmem>>, vector<1x8x128xf32>,
      %c0_38 = arith.constant 0 : index
      %c0_39 = arith.constant 0 : index
      %c0_40 = arith.constant 0 : index
      %58 = vector.load %arg9[%c0_38, %c0_39, %c0_40] : memref<1x8x128xf32, #tpu.memory_space<vmem>>, vector<1x8x128xf32>
      %59 = arith.mulf %34, %35 : vector<4x8x128xf32>
      %cst_41 = arith.constant dense<0.000000e+00> : vector<8x128xf32>
      %60 = vector.multi_reduction <add>, %59, %cst_41 [0] : vector<4x8x128xf32> to vector<8x128xf32>
      %61 = vector.shape_cast %60 : vector<8x128xf32> to vector<1x8x128xf32>
      %62 = arith.addf %58, %61 : vector<1x8x128xf32>
      %c0_42 = arith.constant 0 : index
      %c0_43 = arith.constant 0 : index
      %c0_44 = arith.constant 0 : index
      %63 = vector.load %arg9[%c0_42, %c0_43, %c0_44] : memref<1x8x128xf32, #tpu.memory_space<vmem>>, vector<1x8x128xf32>
      tpu.vector_store %arg9[%c0_42, %c0_43, %c0_44], %62 {strides = array<i32>} : memref<1x8x128xf32, #tpu.memory_space<vmem>>, vector<1x8x128xf32>,
    } else {
    }
    return
  }
  func.func @transform_0(%arg0: i32, %arg1: i32) -> i32 {
    %c0_i32 = arith.constant 0 : i32
    %c0_i32_0 = arith.constant 0 : i32
    return %c0_i32 : i32
  }
  func.func @transform_1(%arg0: i32, %arg1: i32) -> (i32, i32) {
    %c1_i32 = arith.constant 1 : i32
    %0 = arith.muli %arg0, %c1_i32 : i32
    %1 = arith.addi %0, %arg1 : i32
    %c0_i32 = arith.constant 0 : i32
    %2 = arith.minsi %1, %c0_i32 : i32
    %c0_i32_0 = arith.constant 0 : i32
    %c0_i32_1 = arith.constant 0 : i32
    return %2, %c0_i32_0 : i32, i32
  }
  func.func @transform_2(%arg0: i32, %arg1: i32) -> (i32, i32) {
    %c1_i32 = arith.constant 1 : i32
    %0 = arith.muli %arg0, %c1_i32 : i32
    %1 = arith.addi %0, %arg1 : i32
    %c0_i32 = arith.constant 0 : i32
    %2 = arith.minsi %1, %c0_i32 : i32
    %c0_i32_0 = arith.constant 0 : i32
    %c0_i32_1 = arith.constant 0 : i32
    return %2, %c0_i32_0 : i32, i32
  }
  func.func @transform_3(%arg0: i32, %arg1: i32) -> (i32, i32, i32) {
    %c0_i32 = arith.constant 0 : i32
    %c0_i32_0 = arith.constant 0 : i32
    %c0_i32_1 = arith.constant 0 : i32
    return %arg0, %c0_i32, %c0_i32_0 : i32, i32, i32
  }
  func.func @transform_4(%arg0: i32, %arg1: i32) -> (i32, i32, i32) {
    %c0_i32 = arith.constant 0 : i32
    %c0_i32_0 = arith.constant 0 : i32
    %c0_i32_1 = arith.constant 0 : i32
    return %arg0, %c0_i32, %c0_i32_0 : i32, i32, i32
  }
  func.func @transform_5(%arg0: i32, %arg1: i32) -> (i32, i32, i32) {
    %c0_i32 = arith.constant 0 : i32
    %c0_i32_0 = arith.constant 0 : i32
    %c0_i32_1 = arith.constant 0 : i32
    return %arg0, %c0_i32, %c0_i32_0 : i32, i32, i32
  }
  func.func @transform_6(%arg0: i32, %arg1: i32) -> (i32, i32, i32) {
    %c0_i32 = arith.constant 0 : i32
    %c0_i32_0 = arith.constant 0 : i32
    %c0_i32_1 = arith.constant 0 : i32
    return %arg0, %c0_i32, %c0_i32_0 : i32, i32, i32
  }
  func.func @transform_7(%arg0: i32, %arg1: i32) -> (i32, i32, i32) {
    %c0_i32 = arith.constant 0 : i32
    %c0_i32_0 = arith.constant 0 : i32
    %c0_i32_1 = arith.constant 0 : i32
    return %arg0, %c0_i32, %c0_i32_0 : i32, i32, i32
  }
}

</mosaic_0001>

<llo_original>
// kernel: tpu_custom_call.1
$region0: #{tpu_custom_call.1}
  #allocation0 [shape = 'u32[]', space=smem, size = 0x4, offset = 0x4, fixed_abs, tag = 'smem constant byte address 0x4 - core index']
  #allocation1 [shape = 'u32[144,128]{1,0:T(1,128)}', space=vmem, size = 0x12000, scoped, tag = 'internal scratch']
  %s0 = inlined_call_operand.hbm [shape: f32[2], index: 0, kind: input, shape index: {}]
  %s1 = inlined_call_operand.hbm [shape: f32[32,128], index: 1, kind: input, shape index: {}]
  %s2 = inlined_call_operand.hbm [shape: f32[32,128], index: 2, kind: input, shape index: {}]
  %s3 = inlined_call_operand.hbm [shape: f32[1,8,128], index: 3, kind: output, shape index: {0}]
  %s4 = inlined_call_operand.hbm [shape: f32[1,8,128], index: 4, kind: output, shape index: {1}]
  %s5 = inlined_call_operand.hbm [shape: f32[1,8,128], index: 5, kind: output, shape index: {2}]
  %s6 = inlined_call_operand.hbm [shape: f32[1,8,128], index: 6, kind: output, shape index: {3}]
  %s7 = inlined_call_operand.hbm [shape: f32[1,8,128], index: 7, kind: output, shape index: {4}]
  %8 = xla_tuple %s3, %s4, %s5, %s6, %s7
  %s9 = sld [smem:[#allocation0]]
  $region78: #{tpu_custom_call.1} parent=0
    _
  %s11 = ssub.s32 1, %s9
  %s12 = scalar_select 0, %s11, %s9
  $region1: #{tpu_custom_call.1} parent=0
    #allocation2 [shape = 'u8[512]{0}', space=smem, size = 0x200, scoped, tag = 'input window, operand 0, single buffered']
    #allocation3 [shape = 's32[1]{0}', space=sflag, size = 0x4, scoped, tag = 'scoped memory for tpu_custom_call.1']
    #allocation4 [shape = 's32[1]{0}', space=sflag, size = 0x4, scoped, tag = 'scoped memory for tpu_custom_call.1']
    #allocation5 [shape = 's32[1]{0}', space=sflag, size = 0x4, scoped, tag = 'scoped memory for tpu_custom_call.1']
    #allocation6 [shape = 'u8[16384]{0}', space=vmem, size = 0x4000, scoped, tag = 'input window, operand 1, single buffered']
    #allocation7 [shape = 'u8[16384]{0}', space=vmem, size = 0x4000, scoped, tag = 'input window, operand 2, single buffered']
    #allocation8 [shape = 's32[1]{0}', space=sflag, size = 0x4, scoped, tag = 'scoped memory for tpu_custom_call.1']
    #allocation9 [shape = 'u8[4096]{0}', space=vmem, size = 0x1000, scoped, tag = 'output window, operand 0, single buffered']
    #allocation10 [shape = 'u8[4096]{0}', space=vmem, size = 0x1000, scoped, tag = 'output window, operand 1, single buffered']
    #allocation11 [shape = 's32[1]{0}', space=sflag, size = 0x4, scoped, tag = 'scoped memory for tpu_custom_call.1']
    #allocation12 [shape = 'u8[4096]{0}', space=vmem, size = 0x1000, scoped, tag = 'output window, operand 2, single buffered']
    #allocation13 [shape = 'u8[4096]{0}', space=vmem, size = 0x1000, scoped, tag = 'output window, operand 3, single buffered']
    #allocation14 [shape = 's32[1]{0}', space=sflag, size = 0x4, scoped, tag = 'scoped memory for tpu_custom_call.1']
    #allocation15 [shape = 'u8[4096]{0}', space=vmem, size = 0x1000, scoped, tag = 'output window, operand 4, single buffered']
    %13 = vsyncpa [#allocation5], 0
    %14 = vsyncpa [#allocation3], 0
    %15 = vsyncpa [#allocation8], 0
    %16 = vsyncpa [#allocation4], 0
    %17 = vsyncpa [#allocation11], 0
    %18 = vsyncpa [#allocation14], 0
    // Predicated region
    $region2: #{tpu_custom_call.1} parent=1 // pred_check
      _
    $region3: #{tpu_custom_call.1} parent=1 // pred_check_branch
      %20 = sbr.rel (0) target = $region5
    $region4: #{tpu_custom_call.1} parent=1 // pred_region
      %s22 = ssub.s32 16, 16
      %23 = vsyncadd [#allocation5], %s22
      %26 = dma.hbm_to_smem %s0, 16, [#allocation2], [#allocation5]
    $region5: #{tpu_custom_call.1} parent=1 // pred_fallthru
      _
    // Predicated region
    $region6: #{tpu_custom_call.1} parent=1 // pred_check
      _
    $region7: #{tpu_custom_call.1} parent=1 // pred_check_branch
      %28 = sbr.rel (0) target = $region9
    $region8: #{tpu_custom_call.1} parent=1 // pred_region
      %s29 = sadd.s32 0, 0
      %p30 = scmp.lt.s32.totalorder %s29, 0
      %s31 = scalar_select %p30, %s29, 0
      %s32 = smul.u32 4, %s31
      %s34 = ssub.s32 512, 512
      %35 = vsyncadd [#allocation3], %s34
      %s36 = smul.addr %s32, 128
      %s37 = scalar_lea.hbm %s1, %s36
      %s38 = sshll.u32 [#allocation6], 4
      %s39 = int_to_ptr.vmem [resolvable:$true] %s38
      %44 = dma.hbm_to_vmem [thread:$0]  %s37, 512, %s39, [#allocation3], 128, 128, 8
    $region9: #{tpu_custom_call.1} parent=1 // pred_fallthru
      _
    // Predicated region
    $region10: #{tpu_custom_call.1} parent=1 // pred_check
      _
    $region11: #{tpu_custom_call.1} parent=1 // pred_check_branch
      %46 = sbr.rel (0) target = $region13
    $region12: #{tpu_custom_call.1} parent=1 // pred_region
      %s47 = sadd.s32 0, 0
      %p48 = scmp.lt.s32.totalorder %s47, 0
      %s49 = scalar_select %p48, %s47, 0
      %s50 = smul.u32 4, %s49
      %s52 = ssub.s32 512, 512
      %53 = vsyncadd [#allocation8], %s52
      %s54 = smul.addr %s50, 128
      %s55 = scalar_lea.hbm %s2, %s54
      %s56 = sshll.u32 [#allocation7], 4
      %s57 = int_to_ptr.vmem [resolvable:$true] %s56
      %62 = dma.hbm_to_vmem [thread:$0]  %s55, 512, %s57, [#allocation8], 128, 128, 8
    $region13: #{tpu_custom_call.1} parent=1 // pred_fallthru
      _
    // Predicated region
    $region14: #{tpu_custom_call.1} parent=1 // pred_check
      _
    $region15: #{tpu_custom_call.1} parent=1 // pred_check_branch
      %64 = sbr.rel (0) target = $region17
    $region16: #{tpu_custom_call.1} parent=1 // pred_region
      %65 = dma.done [#allocation5], 16
    $region17: #{tpu_custom_call.1} parent=1 // pred_fallthru
      _
    // Predicated region
    $region18: #{tpu_custom_call.1} parent=1 // pred_check
      _
    $region19: #{tpu_custom_call.1} parent=1 // pred_check_branch
      %67 = sbr.rel (0) target = $region21
    $region20: #{tpu_custom_call.1} parent=1 // pred_region
      %68 = dma.done [#allocation3], 512
    $region21: #{tpu_custom_call.1} parent=1 // pred_fallthru
      _
    // Predicated region
    $region22: #{tpu_custom_call.1} parent=1 // pred_check
      _
    $region23: #{tpu_custom_call.1} parent=1 // pred_check_branch
      %70 = sbr.rel (0) target = $region25
    $region24: #{tpu_custom_call.1} parent=1 // pred_region
      %71 = dma.done [#allocation8], 512
    $region25: #{tpu_custom_call.1} parent=1 // pred_fallthru
      _
    %72 = sfence
    %s73 = sadd.s32 0, 0
    %p74 = scmp.lt.s32.totalorder %s73, 0
    %s75 = scalar_select %p74, %s73, 0
    %s76 = smul.u32 4, %s75
    %s77 = sadd.s32 0, 0
    %p78 = scmp.lt.s32.totalorder %s77, 0
    %s79 = scalar_select %p78, %s77, 0
    %s80 = smul.u32 4, %s79
    %p81 = scmp.eq.s32.totalorder 0, 0
    // Predicated region
    $region26: #{tpu_custom_call.1} parent=1 // pred_check
      %p82 = pneg %p81
    $region27: #{tpu_custom_call.1} parent=1 // pred_check_branch
      %84 = sbr.rel (%p82) target = $region29
    $region28: #{tpu_custom_call.1} parent=1 // pred_region
      %85 = vst [vmem:[#allocation9] sm:$0xff] 0.0
      %86 = vst [vmem:[#allocation10] sm:$0xff] 0.0
      %87 = vst [vmem:[#allocation12] sm:$0xff] 0.0
      %88 = vst [vmem:[#allocation13] sm:$0xff] 0.0
      %89 = vst [vmem:[#allocation15] sm:$0xff] 0.0
    $region29: #{tpu_custom_call.1} parent=1 // pred_fallthru
      _
    %s90 = sld [smem:[#allocation2]]
    %s91 = sld [smem:[#allocation2 + $0x1]]
    %v92 = vld [vmem:[#allocation6] sm:$0xff]
    %v93 = vld [vmem:[#allocation6 + $0x8] sm:$0xff]
    %v94 = vld [vmem:[#allocation6 + $0x10] sm:$0xff]
    %v95 = vld [vmem:[#allocation6 + $0x18] sm:$0xff]
    %v96 = vstv %s90
    %v97 = vsub.f32 %v92, %v96
    %v98 = vsub.f32 %v93, %v96
    %v99 = vsub.f32 %v94, %v96
    %v100 = vsub.f32 %v95, %v96
    %v101 = vld [vmem:[#allocation7] sm:$0xff]
    %v102 = vld [vmem:[#allocation7 + $0x8] sm:$0xff]
    %v103 = vld [vmem:[#allocation7 + $0x10] sm:$0xff]
    %v104 = vld [vmem:[#allocation7 + $0x18] sm:$0xff]
    %v105 = vstv %s91
    %v106 = vsub.f32 %v101, %v105
    %v107 = vsub.f32 %v102, %v105
    %v108 = vsub.f32 %v103, %v105
    %v109 = vsub.f32 %v104, %v105
    %s110 = sadd.s32 0, 0
    %s111 = smul.u32 %s110, 4096
    %s112 = sadd.s32 %s111, 4096
    %p113 = scmp.gt.s32.totalorder %s112, 3000
    %p114 = scmp.le.s32.totalorder %s112, 3000
    // Predicated region
    $region30: #{tpu_custom_call.1} parent=1 // pred_check
      %p115 = pneg %p114
    $region31: #{tpu_custom_call.1} parent=1 // pred_check_branch
      %117 = sbr.rel (%p115) target = $region33
    $region32: #{tpu_custom_call.1} parent=1 // pred_region
      %v118 = vld [vmem:[#allocation9] sm:$0xff]
      %v119 = vadd.f32 %v97, %v98
      %v120 = vadd.f32 %v119, %v99
      %v121 = vadd.f32 %v120, %v100
      %v122 = vadd.f32 %v118, %v121
      %123 = vst [vmem:[#allocation9] sm:$0xff] %v122
      %v124 = vld [vmem:[#allocation10] sm:$0xff]
      %v125 = vadd.f32 %v106, %v107
      %v126 = vadd.f32 %v125, %v108
      %v127 = vadd.f32 %v126, %v109
      %v128 = vadd.f32 %v124, %v127
      %129 = vst [vmem:[#allocation10] sm:$0xff] %v128
      %v130 = vld [vmem:[#allocation12] sm:$0xff]
      %v131 = vmul.f32 %v97, %v97
      %v132 = vmul.f32 %v98, %v98
      %v133 = vmul.f32 %v99, %v99
      %v134 = vmul.f32 %v100, %v100
      %v135 = vadd.f32 %v131, %v132
      %v136 = vadd.f32 %v135, %v133
      %v137 = vadd.f32 %v136, %v134
      %v138 = vadd.f32 %v130, %v137
      %139 = vst [vmem:[#allocation12] sm:$0xff] %v138
      %v140 = vld [vmem:[#allocation13] sm:$0xff]
      %v141 = vmul.f32 %v106, %v106
      %v142 = vmul.f32 %v107, %v107
      %v143 = vmul.f32 %v108, %v108
      %v144 = vmul.f32 %v109, %v109
      %v145 = vadd.f32 %v141, %v142
      %v146 = vadd.f32 %v145, %v143
      %v147 = vadd.f32 %v146, %v144
      %v148 = vadd.f32 %v140, %v147
      %149 = vst [vmem:[#allocation13] sm:$0xff] %v148
      %v150 = vld [vmem:[#allocation15] sm:$0xff]
      %v151 = vmul.f32 %v97, %v106
      %v152 = vmul.f32 %v98, %v107
      %v153 = vmul.f32 %v99, %v108
      %v154 = vmul.f32 %v100, %v109
      %v155 = vadd.f32 %v151, %v152
      %v156 = vadd.f32 %v155, %v153
      %v157 = vadd.f32 %v156, %v154
      %v158 = vadd.f32 %v150, %v157
      %159 = vst [vmem:[#allocation15] sm:$0xff] %v158
    $region33: #{tpu_custom_call.1} parent=1 // pred_fallthru
      _
    // Predicated region
    $region34: #{tpu_custom_call.1} parent=1 // pred_check
      %p160 = pneg %p113
    $region35: #{tpu_custom_call.1} parent=1 // pred_check_branch
      %162 = sbr.rel (%p160) target = $region37
    $region36: #{tpu_custom_call.1} parent=1 // pred_region
      %v163 = vlaneseq
      %v164 = vshrl.u32 %v163, 7
      %v165 = vadd.s32 %v164, 8
      %v166 = vadd.s32 %v164, 16
      %v167 = vadd.s32 %v164, 24
      %v168 = vmul.u32 %v164, 128
      %v169 = vmul.u32 %v165, 128
      %v170 = vmul.u32 %v166, 128
      %v171 = vmul.u32 %v167, 128
      %v172 = vstv %s111
      %v173 = vadd.s32 %v172, %v168
      %v174 = vadd.s32 %v172, %v169
      %v175 = vadd.s32 %v172, %v170
      %v176 = vadd.s32 %v172, %v171
      %v177 = vlaneseq
      %v178 = vand.u32 %v177, 127
      %v179 = vadd.s32 %v173, %v178
      %v180 = vadd.s32 %v174, %v178
      %v181 = vadd.s32 %v175, %v178
      %v182 = vadd.s32 %v176, %v178
      %vm183 = vcmp.lt.s32.totalorder %v179, 3000
      %vm184 = vcmp.lt.s32.totalorder %v180, 3000
      %vm185 = vcmp.lt.s32.totalorder %v181, 3000
      %vm186 = vcmp.lt.s32.totalorder %v182, 3000
      %v187 = vsel %vm183, %v97, 0.0
      %v188 = vsel %vm184, %v98, 0.0
      %v189 = vsel %vm185, %v99, 0.0
      %v190 = vsel %vm186, %v100, 0.0
      %v191 = vsel %vm183, %v106, 0.0
      %v192 = vsel %vm184, %v107, 0.0
      %v193 = vsel %vm185, %v108, 0.0
      %v194 = vsel %vm186, %v109, 0.0
      %v195 = vld [vmem:[#allocation9] sm:$0xff]
      %v196 = vadd.f32 %v187, %v188
      %v197 = vadd.f32 %v196, %v189
      %v198 = vadd.f32 %v197, %v190
      %v199 = vadd.f32 %v195, %v198
      %200 = vst [vmem:[#allocation9] sm:$0xff] %v199
      %v201 = vld [vmem:[#allocation10] sm:$0xff]
      %v202 = vadd.f32 %v191, %v192
      %v203 = vadd.f32 %v202, %v193
      %v204 = vadd.f32 %v203, %v194
      %v205 = vadd.f32 %v201, %v204
      %206 = vst [vmem:[#allocation10] sm:$0xff] %v205
      %v207 = vld [vmem:[#allocation12] sm:$0xff]
      %v208 = vmul.f32 %v187, %v187
      %v209 = vmul.f32 %v188, %v188
      %v210 = vmul.f32 %v189, %v189
      %v211 = vmul.f32 %v190, %v190
      %v212 = vadd.f32 %v208, %v209
      %v213 = vadd.f32 %v212, %v210
      %v214 = vadd.f32 %v213, %v211
      %v215 = vadd.f32 %v207, %v214
      %216 = vst [vmem:[#allocation12] sm:$0xff] %v215
      %v217 = vld [vmem:[#allocation13] sm:$0xff]
      %v218 = vmul.f32 %v191, %v191
      %v219 = vmul.f32 %v192, %v192
      %v220 = vmul.f32 %v193, %v193
      %v221 = vmul.f32 %v194, %v194
      %v222 = vadd.f32 %v218, %v219
      %v223 = vadd.f32 %v222, %v220
      %v224 = vadd.f32 %v223, %v221
      %v225 = vadd.f32 %v217, %v224
      %226 = vst [vmem:[#allocation13] sm:$0xff] %v225
      %v227 = vld [vmem:[#allocation15] sm:$0xff]
      %v228 = vmul.f32 %v187, %v191
      %v229 = vmul.f32 %v188, %v192
      %v230 = vmul.f32 %v189, %v193
      %v231 = vmul.f32 %v190, %v194
      %v232 = vadd.f32 %v228, %v229
      %v233 = vadd.f32 %v232, %v230
      %v234 = vadd.f32 %v233, %v231
      %v235 = vadd.f32 %v227, %v234
      %236 = vst [vmem:[#allocation15] sm:$0xff] %v235
    $region37: #{tpu_custom_call.1} parent=1 // pred_fallthru
      _
    // Predicated region
    $region38: #{tpu_custom_call.1} parent=1 // pred_check
      _
    $region39: #{tpu_custom_call.1} parent=1 // pred_check_branch
      %238 = sbr.rel (0) target = $region41
    $region40: #{tpu_custom_call.1} parent=1 // pred_region
      %s240 = ssub.s32 128, 128
      %241 = vsyncadd [#allocation4], %s240
      %s243 = sshll.u32 [#allocation9], 4
      %s244 = int_to_ptr.vmem [resolvable:$true] %s243
      %246 = dma.vmem_to_hbm [thread:$0]  %s244, 128, %s3, [#allocation4]
    $region41: #{tpu_custom_call.1} parent=1 // pred_fallthru
      _
    // Predicated region
    $region42: #{tpu_custom_call.1} parent=1 // pred_check
      _
    $region43: #{tpu_custom_call.1} parent=1 // pred_check_branch
      %248 = sbr.rel (0) target = $region45
    $region44: #{tpu_custom_call.1} parent=1 // pred_region
      %s250 = ssub.s32 128, 128
      %251 = vsyncadd [#allocation11], %s250
      %s253 = sshll.u32 [#allocation10], 4
      %s254 = int_to_ptr.vmem [resolvable:$true] %s253
      %256 = dma.vmem_to_hbm [thread:$0]  %s254, 128, %s4, [#allocation11]
    $region45: #{tpu_custom_call.1} parent=1 // pred_fallthru
      _
    // Predicated region
    $region46: #{tpu_custom_call.1} parent=1 // pred_check
      _
    $region47: #{tpu_custom_call.1} parent=1 // pred_check_branch
      %258 = sbr.rel (0) target = $region49
    $region48: #{tpu_custom_call.1} parent=1 // pred_region
      %s260 = ssub.s32 128, 128
      %261 = vsyncadd [#allocation11], %s260
      %s263 = sshll.u32 [#allocation12], 4
      %s264 = int_to_ptr.vmem [resolvable:$true] %s263
      %266 = dma.vmem_to_hbm [thread:$0]  %s264, 128, %s5, [#allocation11]
    $region49: #{tpu_custom_call.1} parent=1 // pred_fallthru
      _
    // Predicated region
    $region50: #{tpu_custom_call.1} parent=1 // pred_check
      _
    $region51: #{tpu_custom_call.1} parent=1 // pred_check_branch
      %268 = sbr.rel (0) target = $region53
    $region52: #{tpu_custom_call.1} parent=1 // pred_region
      %s270 = ssub.s32 128, 128
      %271 = vsyncadd [#allocation14], %s270
      %s273 = sshll.u32 [#allocation13], 4
      %s274 = int_to_ptr.vmem [resolvable:$true] %s273
      %276 = dma.vmem_to_hbm [thread:$0]  %s274, 128, %s6, [#allocation14]
    $region53: #{tpu_custom_call.1} parent=1 // pred_fallthru
      _
    // Predicated region
    $region54: #{tpu_custom_call.1} parent=1 // pred_check
      _
    $region55: #{tpu_custom_call.1} parent=1 // pred_check_branch
      %278 = sbr.rel (0) target = $region57
    $region56: #{tpu_custom_call.1} parent=1 // pred_region
      %s280 = ssub.s32 128, 128
      %281 = vsyncadd [#allocation14], %s280
      %s283 = sshll.u32 [#allocation15], 4
      %s284 = int_to_ptr.vmem [resolvable:$true] %s283
      %286 = dma.vmem_to_hbm [thread:$0]  %s284, 128, %s7, [#allocation14]
    $region57: #{tpu_custom_call.1} parent=1 // pred_fallthru
      _
    // Predicated region
    $region58: #{tpu_custom_call.1} parent=1 // pred_check
      _
    $region59: #{tpu_custom_call.1} parent=1 // pred_check_branch
      %288 = sbr.rel (0) target = $region61
    $region60: #{tpu_custom_call.1} parent=1 // pred_region
      %289 = dma.done [#allocation4], 128
    $region61: #{tpu_custom_call.1} parent=1 // pred_fallthru
      _
    // Predicated region
    $region62: #{tpu_custom_call.1} parent=1 // pred_check
      _
    $region63: #{tpu_custom_call.1} parent=1 // pred_check_branch
      %291 = sbr.rel (0) target = $region65
    $region64: #{tpu_custom_call.1} parent=1 // pred_region
      %292 = dma.done [#allocation11], 128
    $region65: #{tpu_custom_call.1} parent=1 // pred_fallthru
      _
    // Predicated region
    $region66: #{tpu_custom_call.1} parent=1 // pred_check
      _
    $region67: #{tpu_custom_call.1} parent=1 // pred_check_branch
      %294 = sbr.rel (0) target = $region69
    $region68: #{tpu_custom_call.1} parent=1 // pred_region
      %295 = dma.done [#allocation11], 128
    $region69: #{tpu_custom_call.1} parent=1 // pred_fallthru
      _
    // Predicated region
    $region70: #{tpu_custom_call.1} parent=1 // pred_check
      _
    $region71: #{tpu_custom_call.1} parent=1 // pred_check_branch
      %297 = sbr.rel (0) target = $region73
    $region72: #{tpu_custom_call.1} parent=1 // pred_region
      %298 = dma.done [#allocation14], 128
    $region73: #{tpu_custom_call.1} parent=1 // pred_fallthru
      _
    // Predicated region
    $region74: #{tpu_custom_call.1} parent=1 // pred_check
      _
    $region75: #{tpu_custom_call.1} parent=1 // pred_check_branch
      %300 = sbr.rel (0) target = $region77
    $region76: #{tpu_custom_call.1} parent=1 // pred_region
      %301 = dma.done [#allocation14], 128
    $region77: #{tpu_custom_call.1} parent=1 // pred_fallthru
      _
    %302 = vsyncpa [#allocation3], 1
    %303 = vsyncpa [#allocation8], 1
    %304 = vsyncpa [#allocation4], 1
    %305 = vsyncpa [#allocation11], 1
    %306 = vsyncpa [#allocation14], 1
    %307 = vsyncpa [#allocation5], 1

</llo_original>
